<compile_context>
chip_gen: v7x
topology: tpu7x:2x2x1
jax: 0.10.0
libtpu: 0.0.40
codegen_flags: <defaults>
</compile_context>

<pallas_src>
import functools

import jax
import jax.numpy as jnp
from jax.experimental import pallas as pl
from jax.experimental.pallas import tpu as pltpu


def _make_geomgcn_kernel(tile_v: int, tile_u: int, fuse_epilogue: bool):
    """Build the per-(division, v-tile, u-tile) kernel body."""

    def kernel(x_ref, w_ref, a_ref, norm_ref, o_ref, wh_ref):
        # x_ref:    (N, F_in)        full feature matrix (resident, DMA'd once)
        # w_ref:    (F_in, H*F_out)  head-fused, pre-transposed weight of division d
        # a_ref:    (tile_v, tile_u) bf16 adjacency tile A_d[v_tile, u_tile]
        # norm_ref: (N, 1)           per-node normalization (resident)
        # o_ref:    (tile_v, H*F_out) output / f32 accumulator (resident across u)
        # wh_ref:   (N, H*F_out)     VMEM scratch: projected features of division d
        v = pl.program_id(1)
        u = pl.program_id(2)

        # Once per division: project ALL nodes with the head-fused weight and
        # apply the message-side norm.  Stays resident in VMEM for every
        # (v, u) adjacency tile of this division.
        @pl.when((v == 0) & (u == 0))
        def _project():
            wh_ref[...] = (
                jnp.dot(x_ref[...], w_ref[...], preferred_element_type=jnp.float32)
                * norm_ref[...]
            )

        # Zero the output-resident accumulator at the start of the u reduction.
        @pl.when(u == 0)
        def _zero():
            o_ref[...] = jnp.zeros_like(o_ref)

        # Aggregate: acc[v_tile] += A_d[v_tile, u_tile] @ Wh_d[u_tile].
        u_start = pl.multiple_of(u * tile_u, tile_u)
        wh_u = wh_ref[pl.ds(u_start, tile_u), :]
        o_ref[...] += jnp.dot(
            a_ref[...].astype(jnp.float32), wh_u, preferred_element_type=jnp.float32
        )

        if fuse_epilogue:
            # Valid only for ggcn_merge='cat' (epilogue is elementwise, so it
            # commutes with the concat over divisions).
            @pl.when(u == pl.num_programs(2) - 1)
            def _epilogue():
                v_start = pl.multiple_of(v * tile_v, tile_v)
                nv = norm_ref[pl.ds(v_start, tile_v), :]
                o_ref[...] = jnp.maximum(o_ref[...] * nv, 0.0)

    return kernel


def geomgcn_division_outputs(x, w_fused, adj, norm, *, fuse_epilogue,
                             tile_v=None, tile_u=None):
    """Pallas hot path.

    x:        [N, F_in]            float32 node features
    w_fused:  [D, F_in, H*F_out]   head-fused, pre-transposed weights
    adj:      [D, N, N]            bf16 (or f32) dense adjacency, A[d, v, u]
    norm:     [N, 1]               per-node normalization
    returns:  [D, N, H*F_out]      (with norm*ReLU epilogue fused if requested)
    """
    D, F_in, HF = w_fused.shape
    N = x.shape[0]

    if adj.dtype != jnp.bfloat16:
        adj = adj.astype(jnp.bfloat16)  # 0/1 entries -> lossless, halves HBM traffic

    # Tile the node axes of the adjacency.  Tiles must be multiples of
    # (8, 128) unless they equal the full dimension.
    # TODO(synk): pad N to a multiple of 512 for very large graphs so the
    # full-N fallback (and the resident Wh scratch) never exceeds VMEM.
    if tile_v is None:
        tile_v = 512 if (N % 512 == 0) else N
    if tile_u is None:
        tile_u = 512 if (N % 512 == 0) else N

    grid = (D, N // tile_v, N // tile_u)
    kernel = _make_geomgcn_kernel(tile_v, tile_u, fuse_epilogue)

    return pl.pallas_call(
        kernel,
        out_shape=jax.ShapeDtypeStruct((D, N, HF), jnp.float32),
        grid_spec=pltpu.PrefetchScalarGridSpec(
            num_scalar_prefetch=0,
            grid=grid,
            in_specs=[
                # X: full matrix, constant index -> DMA'd once, stays resident.
                pl.BlockSpec((N, F_in), lambda d, v, u: (0, 0)),
                # Fused weight: re-DMA'd only when d changes (slow axis).
                pl.BlockSpec((None, F_in, HF), lambda d, v, u: (d, 0, 0)),
                # Adjacency tile: each element loaded exactly once overall.
                pl.BlockSpec((None, tile_v, tile_u), lambda d, v, u: (d, v, u)),
                # Per-node norm: resident.
                pl.BlockSpec((N, 1), lambda d, v, u: (0, 0)),
            ],
            out_specs=pl.BlockSpec((None, tile_v, HF), lambda d, v, u: (d, v, 0)),
            scratch_shapes=[pltpu.VMEM((N, HF), jnp.float32)],
        ),
        compiler_params=pltpu.CompilerParams(
            # d is parallel (megacore-safe: Wh is re-projected at the first
            # step of every division).  v must stay "arbitrary" because the
            # Wh scratch is carried across v tiles; u is the reduction axis.
            dimension_semantics=("parallel", "arbitrary", "arbitrary"),
            # Conservative limit valid on v5e/v6e/v7x; raise for larger tiles
            # on v5e/v6e (128 MiB physical VMEM).
            vmem_limit_bytes=48 * 1024 * 1024,
        ),
    )(x, w_fused, adj, norm)


def geomgcn_dgl_forward(x, weights, adj, norm,
                        ggcn_merge="cat", channel_merge="cat"):
    """Full GeomGCNDGL forward (activation = ReLU, dropout = identity)."""
    H, D, F_out, F_in = weights.shape
    N = x.shape[0]
    HF = H * F_out

    # One-time layout plumbing: torch Linear [F_out, F_in] -> head-fused,
    # pre-transposed [D, F_in, H*F_out] (column block h*F_out:(h+1)*F_out is head h).
    w_fused = jnp.transpose(weights, (1, 3, 0, 2)).reshape(D, F_in, HF)

    fuse = ggcn_merge == "cat"
    per_div = geomgcn_division_outputs(
        x, w_fused, adj, norm, fuse_epilogue=fuse)          # [D, N, H*F_out]
    per_div = per_div.reshape(D, N, H, F_out)

    if ggcn_merge == "cat":
        # norm * ReLU already applied in-kernel; just lay out [h][d][F_out].
        head_out = jnp.transpose(per_div, (2, 1, 0, 3)).reshape(H, N, D * F_out)
    else:
        agg = jnp.mean(per_div, axis=0)                      # [N, H, F_out]
        agg = jnp.transpose(agg, (1, 0, 2))                  # [H, N, F_out]
        head_out = jax.nn.relu(agg * norm[None, :, :])

    if channel_merge == "cat":
        return jnp.transpose(head_out, (1, 0, 2)).reshape(N, -1)
    return jnp.mean(head_out, axis=0)


def _reference_forward(x, weights, adj, norm,
                       ggcn_merge="cat", channel_merge="cat"):
    """Pure-JAX reference mirroring the PyTorch/DGL semantics."""
    H, D, F_out, _ = weights.shape
    adj = adj.astype(jnp.float32)
    head_outputs = []
    for h in range(H):
        divs = []
        for d in range(D):
            wh = (x @ weights[h, d].T) * norm
            divs.append(adj[d] @ wh)
        if ggcn_merge == "cat":
            h_new = jnp.concatenate(divs, axis=-1)
        else:
            h_new = jnp.mean(jnp.stack(divs, axis=-1), axis=-1)
        h_new = jax.nn.relu(h_new * norm)
        head_outputs.append(h_new)
    if channel_merge == "cat":
        return jnp.concatenate(head_outputs, axis=1)
    return jnp.mean(jnp.stack(head_outputs), axis=0)


if __name__ == "__main__":
    key = jax.random.PRNGKey(0)
    k_feat, k_w, k_edge, k_div = jax.random.split(key, 4)

    # Small, module-consistent shapes.
    N = 16            # number of graph nodes
    in_feats = 32
    out_feats = 16
    num_divisions = 4
    num_heads = 2

    # Node features.
    x = jax.random.normal(k_feat, (N, in_feats), dtype=jnp.float32)

    # Xavier-uniform weights, torch Linear layout: [out_feats, in_feats].
    bound = jnp.sqrt(6.0 / (in_feats + out_feats))
    weights = jax.random.uniform(
        k_w, (num_heads, num_divisions, out_feats, in_feats),
        minval=-bound, maxval=bound, dtype=jnp.float32)

    # Deterministic random graph: dense edge mask, each edge assigned a division.
    edge_mask = (jax.random.uniform(k_edge, (N, N)) < 0.3).astype(jnp.float32)
    div_idx = jax.random.randint(k_div, (N, N), 0, num_divisions)
    adj_f32 = jnp.stack(
        [edge_mask * (div_idx == d).astype(jnp.float32)
         for d in range(num_divisions)], axis=0)              # [D, N, N], A[d, v, u]
    adj = adj_f32.astype(jnp.bfloat16)                        # 0/1 -> lossless bf16

    # Per-node norm = 1/sqrt(in-degree), clamped (typical GeomGCN preprocessing).
    deg = jnp.maximum(adj_f32.sum(axis=(0, 2)), 1.0)          # [N]
    norm = (1.0 / jnp.sqrt(deg)).reshape(N, 1).astype(jnp.float32)

    out = geomgcn_dgl_forward(x, weights, adj, norm,
                              ggcn_merge="cat", channel_merge="cat")
    out = jax.block_until_ready(out)

    ref = _reference_forward(x, weights, adj_f32, norm,
                             ggcn_merge="cat", channel_merge="cat")
    assert out.shape == (N, num_heads * num_divisions * out_feats), out.shape
    assert jnp.allclose(out, ref, atol=1e-4, rtol=1e-4), "mismatch vs reference"

    print("KERNEL_OK")
</pallas_src>

<mosaic_0001>
module attributes {stable_mosaic.version = 11 : i64} {
  func.func @kernel(%arg0: i32, %arg1: i32, %arg2: i32, %arg3: memref<16x32xf32, #tpu.memory_space<vmem>>, %arg4: memref<1x32x32xf32, #tpu.memory_space<vmem>>, %arg5: memref<1x16x16xbf16, #tpu.memory_space<vmem>>, %arg6: memref<16x1xf32, #tpu.memory_space<vmem>>, %arg7: memref<1x16x32xf32, #tpu.memory_space<vmem>>, %arg8: memref<16x32xf32, #tpu.memory_space<vmem>>) attributes {dimension_semantics = [#tpu.dimension_semantics<parallel>, #tpu.dimension_semantics<arbitrary>, #tpu.dimension_semantics<arbitrary>], iteration_bounds = array<i64: 4, 1, 1>, scalar_prefetch = 0 : i64, scratch_operands = 1 : i64, tpu.core_type = #tpu.core_type<tc>, window_params = [{pipeline_mode = #tpu.pipeline_mode<synchronous>, transform_indices = @transform_0, window_bounds = array<i64: 16, 32>}, {transform_indices = @transform_1, window_bounds = array<i64: 1, 32, 32>}, {transform_indices = @transform_2, window_bounds = array<i64: 1, 16, 16>}, {pipeline_mode = #tpu.pipeline_mode<synchronous>, transform_indices = @transform_3, window_bounds = array<i64: 16, 1>}, {transform_indices = @transform_4, window_bounds = array<i64: 1, 16, 32>}]} {
    %c0_i32 = arith.constant 0 : i32
    %0 = arith.cmpi eq, %arg1, %c0_i32 : i32
    %c0_i32_0 = arith.constant 0 : i32
    %1 = arith.cmpi eq, %arg2, %c0_i32_0 : i32
    %2 = arith.andi %0, %1 : i1
    %3 = arith.extui %2 : i1 to i32
    %c0_i32_1 = arith.constant 0 : i32
    %4 = arith.cmpi ne, %3, %c0_i32_1 : i32
    scf.if %4 {
      %c0_15 = arith.constant 0 : index
      %c0_16 = arith.constant 0 : index
      %25 = vector.load %arg3[%c0_15, %c0_16] : memref<16x32xf32, #tpu.memory_space<vmem>>, vector<16x32xf32>
      %c0_17 = arith.constant 0 : index
      %c0_18 = arith.constant 0 : index
      %c0_19 = arith.constant 0 : index
      %26 = vector.load %arg4[%c0_17, %c0_18, %c0_19] : memref<1x32x32xf32, #tpu.memory_space<vmem>>, vector<1x32x32xf32>
      %27 = vector.shape_cast %26 : vector<1x32x32xf32> to vector<32x32xf32>
      %cst_20 = arith.constant dense<0.000000e+00> : vector<16x32xf32>
      %28 = tpu.matmul %25, %27, %cst_20 {dimension_numbers = #tpu.dot_dimension_numbers<[1], [0], [0], [1], [0, 0, 1, 1], [], []>} : vector<16x32xf32>, vector<32x32xf32>, vector<16x32xf32> -> vector<16x32xf32>
      %c0_21 = arith.constant 0 : index
      %c0_22 = arith.constant 0 : index
      %29 = vector.load %arg6[%c0_21, %c0_22] : memref<16x1xf32, #tpu.memory_space<vmem>>, vector<16x1xf32>
      %30 = vector.broadcast %29 : vector<16x1xf32> to vector<16x32xf32>
      %31 = arith.mulf %28, %30 : vector<16x32xf32>
      %c0_23 = arith.constant 0 : index
      %c0_24 = arith.constant 0 : index
      %32 = vector.load %arg8[%c0_23, %c0_24] : memref<16x32xf32, #tpu.memory_space<vmem>>, vector<16x32xf32>
      tpu.vector_store %arg8[%c0_23, %c0_24], %31 {strides = array<i32>} : memref<16x32xf32, #tpu.memory_space<vmem>>, vector<16x32xf32>,
    } else {
    }
    %c0_i32_2 = arith.constant 0 : i32
    %5 = arith.cmpi eq, %arg2, %c0_i32_2 : i32
    %6 = arith.extui %5 : i1 to i32
    %c0_i32_3 = arith.constant 0 : i32
    %7 = arith.cmpi ne, %6, %c0_i32_3 : i32
    scf.if %7 {
      %cst_15 = arith.constant 0.000000e+00 : f32
      %25 = vector.broadcast %cst_15 : f32 to vector<16x32xf32>
      %c0_16 = arith.constant 0 : index
      %c0_17 = arith.constant 0 : index
      %c0_18 = arith.constant 0 : index
      %26 = vector.load %arg7[%c0_16, %c0_17, %c0_18] : memref<1x16x32xf32, #tpu.memory_space<vmem>>, vector<1x16x32xf32>
      %27 = vector.shape_cast %26 : vector<1x16x32xf32> to vector<16x32xf32>
      %28 = vector.shape_cast %25 : vector<16x32xf32> to vector<1x16x32xf32>
      tpu.vector_store %arg7[%c0_16, %c0_17, %c0_18], %28 {strides = array<i32>} : memref<1x16x32xf32, #tpu.memory_space<vmem>>, vector<1x16x32xf32>,
    } else {
    }
    %c16_i32 = arith.constant 16 : i32
    %8 = arith.muli %arg2, %c16_i32 : i32
    %9 = tpu.assume_multiple %8, 16 : i32
    %10 = arith.index_cast %9 : i32 to index
    %c0 = arith.constant 0 : index
    %11 = vector.load %arg8[%10, %c0] : memref<16x32xf32, #tpu.memory_space<vmem>>, vector<16x32xf32>
    %c0_4 = arith.constant 0 : index
    %c0_5 = arith.constant 0 : index
    %c0_6 = arith.constant 0 : index
    %12 = vector.load %arg7[%c0_4, %c0_5, %c0_6] : memref<1x16x32xf32, #tpu.memory_space<vmem>>, vector<1x16x32xf32>
    %13 = vector.shape_cast %12 : vector<1x16x32xf32> to vector<16x32xf32>
    %c0_7 = arith.constant 0 : index
    %c0_8 = arith.constant 0 : index
    %c0_9 = arith.constant 0 : index
    %14 = vector.load %arg5[%c0_7, %c0_8, %c0_9] : memref<1x16x16xbf16, #tpu.memory_space<vmem>>, vector<1x16x16xbf16>
    %15 = vector.shape_cast %14 : vector<1x16x16xbf16> to vector<16x16xbf16>
    %16 = arith.extf %15 : vector<16x16xbf16> to vector<16x16xf32>
    %cst = arith.constant dense<0.000000e+00> : vector<16x32xf32>
    %17 = tpu.matmul %16, %11, %cst {dimension_numbers = #tpu.dot_dimension_numbers<[1], [0], [0], [1], [0, 0, 1, 1], [], []>} : vector<16x16xf32>, vector<16x32xf32>, vector<16x32xf32> -> vector<16x32xf32>
    %18 = arith.addf %13, %17 : vector<16x32xf32>
    %c0_10 = arith.constant 0 : index
    %c0_11 = arith.constant 0 : index
    %c0_12 = arith.constant 0 : index
    %19 = vector.load %arg7[%c0_10, %c0_11, %c0_12] : memref<1x16x32xf32, #tpu.memory_space<vmem>>, vector<1x16x32xf32>
    %20 = vector.shape_cast %19 : vector<1x16x32xf32> to vector<16x32xf32>
    %21 = vector.shape_cast %18 : vector<16x32xf32> to vector<1x16x32xf32>
    tpu.vector_store %arg7[%c0_10, %c0_11, %c0_12], %21 {strides = array<i32>} : memref<1x16x32xf32, #tpu.memory_space<vmem>>, vector<1x16x32xf32>,
    %c0_i32_13 = arith.constant 0 : i32
    %22 = arith.cmpi eq, %arg2, %c0_i32_13 : i32
    %23 = arith.extui %22 : i1 to i32
    %c0_i32_14 = arith.constant 0 : i32
    %24 = arith.cmpi ne, %23, %c0_i32_14 : i32
    scf.if %24 {
      %c16_i32_15 = arith.constant 16 : i32
      %25 = arith.muli %arg1, %c16_i32_15 : i32
      %26 = tpu.assume_multiple %25, 16 : i32
      %27 = arith.index_cast %26 : i32 to index
      %c0_16 = arith.constant 0 : index
      %28 = vector.load %arg6[%27, %c0_16] : memref<16x1xf32, #tpu.memory_space<vmem>>, vector<16x1xf32>
      %c0_17 = arith.constant 0 : index
      %c0_18 = arith.constant 0 : index
      %c0_19 = arith.constant 0 : index
      %29 = vector.load %arg7[%c0_17, %c0_18, %c0_19] : memref<1x16x32xf32, #tpu.memory_space<vmem>>, vector<1x16x32xf32>
      %30 = vector.shape_cast %29 : vector<1x16x32xf32> to vector<16x32xf32>
      %31 = vector.broadcast %28 : vector<16x1xf32> to vector<16x32xf32>
      %32 = arith.mulf %30, %31 : vector<16x32xf32>
      %cst_20 = arith.constant 0.000000e+00 : f32
      %33 = vector.broadcast %cst_20 : f32 to vector<16x32xf32>
      %34 = arith.maximumf %32, %33 : vector<16x32xf32>
      %c0_21 = arith.constant 0 : index
      %c0_22 = arith.constant 0 : index
      %c0_23 = arith.constant 0 : index
      %35 = vector.load %arg7[%c0_21, %c0_22, %c0_23] : memref<1x16x32xf32, #tpu.memory_space<vmem>>, vector<1x16x32xf32>
      %36 = vector.shape_cast %35 : vector<1x16x32xf32> to vector<16x32xf32>
      %37 = vector.shape_cast %34 : vector<16x32xf32> to vector<1x16x32xf32>
      tpu.vector_store %arg7[%c0_21, %c0_22, %c0_23], %37 {strides = array<i32>} : memref<1x16x32xf32, #tpu.memory_space<vmem>>, vector<1x16x32xf32>,
    } else {
    }
    return
  }
  func.func @transform_0(%arg0: i32, %arg1: i32, %arg2: i32) -> (i32, i32) {
    %c0_i32 = arith.constant 0 : i32
    %c0_i32_0 = arith.constant 0 : i32
    %c0_i32_1 = arith.constant 0 : i32
    return %c0_i32, %c0_i32_0 : i32, i32
  }
  func.func @transform_1(%arg0: i32, %arg1: i32, %arg2: i32) -> (i32, i32, i32) {
    %c0_i32 = arith.constant 0 : i32
    %c0_i32_0 = arith.constant 0 : i32
    %c0_i32_1 = arith.constant 0 : i32
    return %arg0, %c0_i32, %c0_i32_0 : i32, i32, i32
  }
  func.func @transform_2(%arg0: i32, %arg1: i32, %arg2: i32) -> (i32, i32, i32) {
    %c0_i32 = arith.constant 0 : i32
    return %arg0, %arg1, %arg2 : i32, i32, i32
  }
  func.func @transform_3(%arg0: i32, %arg1: i32, %arg2: i32) -> (i32, i32) {
    %c0_i32 = arith.constant 0 : i32
    %c0_i32_0 = arith.constant 0 : i32
    %c0_i32_1 = arith.constant 0 : i32
    return %c0_i32, %c0_i32_0 : i32, i32
  }
  func.func @transform_4(%arg0: i32, %arg1: i32, %arg2: i32) -> (i32, i32, i32) {
    %c0_i32 = arith.constant 0 : i32
    %c0_i32_0 = arith.constant 0 : i32
    return %arg0, %arg1, %c0_i32 : i32, i32, i32
  }
}

</mosaic_0001>

<llo_original>
// kernel: tpu_custom_call.1
$region0: #{tpu_custom_call.1}
  #allocation0 [shape = 'u32[]', space=smem, size = 0x4, offset = 0x4, fixed_abs, tag = 'smem constant byte address 0x4 - core index']
  #allocation1 [shape = 'u32[144,128]{1,0:T(1,128)}', space=vmem, size = 0x12000, scoped, tag = 'internal scratch']
  #allocation2 [shape = 'f32[16,32]{1,0:T(8,128)}', space=vmem, size = 0x2000, scoped, tag = 'scratch operand']
  %s0 = inlined_call_operand.vmem [shape: f32[16,32], index: 0, kind: input, shape index: {}]
  %s1 = inlined_call_operand.hbm [shape: f32[4,32,32], index: 1, kind: input, shape index: {}]
  %s2 = inlined_call_operand.hbm [shape: bf16[4,16,16], index: 2, kind: input, shape index: {}]
  %s3 = inlined_call_operand.vmem [shape: f32[16,1], index: 3, kind: input, shape index: {}]
  %s4 = inlined_call_operand.hbm [shape: f32[4,16,32], index: 4, kind: output, shape index: {}]
  %s5 = sld [smem:[#allocation0]]
  $region69: #{tpu_custom_call.1} parent=0
    _
  %s7 = ssub.s32 1, %s5
  %s8 = scalar_select 0, %s7, %s5
  $region1: #{tpu_custom_call.1} parent=0
    #allocation3 [shape = 'u8[32768]{0}', space=vmem, size = 0x8000, scoped, tag = 'input window, operand 1']
    #allocation4 [shape = 's32[2]{0}', space=sflag, size = 0x8, scoped, tag = 'scoped memory for tpu_custom_call.1']
    #allocation5 [shape = 's32[2]{0}', space=sflag, size = 0x8, scoped, tag = 'scoped memory for tpu_custom_call.1']
    #allocation6 [shape = 'u8[8192]{0}', space=vmem, size = 0x2000, scoped, tag = 'input window, operand 2']
    #allocation7 [shape = 's32[2]{0}', space=sflag, size = 0x8, scoped, tag = 'scoped memory for tpu_custom_call.1']
    #allocation8 [shape = 'u8[16384]{0}', space=vmem, size = 0x4000, scoped, tag = 'output window, operand 0']
    %9 = vsyncpa [#allocation4], 0
    %s10 = scalar_lea.sflag [#allocation4], 1
    %11 = vsyncpa %s10, 0
    %12 = vsyncpa [#allocation7], 0
    %s13 = scalar_lea.sflag [#allocation7], 1
    %14 = vsyncpa %s13, 0
    %15 = vsyncpa [#allocation5], 0
    %s16 = scalar_lea.sflag [#allocation5], 1
    %17 = vsyncpa %s16, 0
    loop: start=0, step=1, limit=6
    $region2: #{tpu_custom_call.1} parent=1 // loop_pre_header
      _
    $region3: #{tpu_custom_call.1} parent=1 // loop_header
      %s19 = sphi 0, %s23
      %p20 = scmp.ge.s32.totalorder %s19, 6
      %s26 = sphi 0, %s45
      %s27 = sphi 0, %s41
      %s28 = sphi 0, %s37
      %s29 = sphi 0, %s26
      %s30 = sphi 0, %s27
      %s31 = sphi 0, %s28
      %s32 = sphi 0, %s29
      %s33 = sphi 0, %s30
      %s34 = sphi 0, %s31
      %s46 = sphi 0, %s46
      %s48 = sphi 0, %s46
      %s49 = sphi 0, %s48
      %s63 = sphi 0, %s49
      %s69 = sphi 0, %s71
      %s72 = sphi 0, %s69
      %s73 = sphi 0, %s72
      %s89 = sphi 0, %s73
      %s99 = sphi 0, %s101
      %s102 = sphi 0, %s99
      %s103 = sphi 0, %s102
      %s119 = sphi 0, %s103
      %s123 = sphi 0, %s123
      %s125 = sphi 0, %s123
      %s126 = sphi 0, %s125
      %s140 = sphi 0, %s126
      %s148 = sphi 0, %s150
      %s151 = sphi 0, %s148
      %s152 = sphi 0, %s151
      %s168 = sphi 0, %s152
    $region4: #{tpu_custom_call.1} parent=1 // loop_header_branch
      %22 = sbr.rel (%p20) target = $region8
    $region5: #{tpu_custom_call.1} parent=1 // loop_body
      %s24 = ssub.s32 %s19, 1
      %s25 = ssub.s32 %s19, 2
      %s35 = sadd.s32 1, %s28
      %p36 = scmp.ge.s32.totalorder %s35, 1
      %s37 = scalar_select %p36, 0, %s35
      %s38 = sadd.s32 1, %s27
      %s39 = scalar_select %p36, %s38, %s27
      %p40 = scmp.ge.s32.totalorder %s39, 1
      %s41 = scalar_select %p40, 0, %s39
      %s42 = sadd.s32 1, %s26
      %s43 = scalar_select %p40, %s42, %s26
      %p44 = scmp.ge.s32.totalorder %s43, 4
      %s45 = scalar_select %p44, 0, %s43
      %s47 = sadd.s32 %s46, 1
      %p50 = scmp.eq.s32.totalorder %s19, 3
      %p51 = scmp.ne.s32.totalorder %s46, %s48
      %p52 = scmp.eq.s32.totalorder %s19, 0
      %p53 = por %p51, %p52
      %p54 = scmp.ne.s32.totalorder %s46, %s48
      %p55 = scmp.eq.s32.totalorder %s24, 3
      %p56 = por %p54, %p55
      %p57 = scmp.ne.s32.totalorder %s48, %s49
      %p58 = scmp.eq.s32.totalorder %s24, 0
      %p59 = por %p57, %p58
      %p60 = scmp.ne.s32.totalorder %s48, %s49
      %p61 = scmp.eq.s32.totalorder %s25, 3
      %p62 = por %p60, %p61
      %p64 = scmp.ne.s32.totalorder %s49, %s63
      %p65 = scmp.eq.s32.totalorder %s25, 0
      %p66 = por %p64, %p65
      %s67 = ssub.s32 %s26, %s45
      %p68 = scmp.eq.s32.totalorder %s67, 0
      %s70 = sadd.s32 %s69, 1
      %s71 = scalar_select %p68, %s69, %s70
      %p74 = pneg %p68
      %p75 = scmp.eq.s32.totalorder %s19, 3
      %p76 = por %p74, %p75
      %p77 = scmp.ne.s32.totalorder %s69, %s72
      %p78 = scmp.eq.s32.totalorder %s19, 0
      %p79 = por %p77, %p78
      %p80 = scmp.ne.s32.totalorder %s69, %s72
      %p81 = scmp.eq.s32.totalorder %s24, 3
      %p82 = por %p80, %p81
      %p83 = scmp.ne.s32.totalorder %s72, %s73
      %p84 = scmp.eq.s32.totalorder %s24, 0
      %p85 = por %p83, %p84
      %p86 = scmp.ne.s32.totalorder %s72, %s73
      %p87 = scmp.eq.s32.totalorder %s25, 3
      %p88 = por %p86, %p87
      %p90 = scmp.ne.s32.totalorder %s73, %s89
      %p91 = scmp.eq.s32.totalorder %s25, 0
      %p92 = por %p90, %p91
      %s93 = ssub.s32 %s26, %s45
      %s94 = ssub.s32 %s27, %s41
      %s95 = sor.u32 %s93, %s94
      %s96 = ssub.s32 %s28, %s37
      %s97 = sor.u32 %s95, %s96
      %p98 = scmp.eq.s32.totalorder %s97, 0
      %s100 = sadd.s32 %s99, 1
      %s101 = scalar_select %p98, %s99, %s100
      %p104 = pneg %p98
      %p105 = scmp.eq.s32.totalorder %s19, 3
      %p106 = por %p104, %p105
      %p107 = scmp.ne.s32.totalorder %s99, %s102
      %p108 = scmp.eq.s32.totalorder %s19, 0
      %p109 = por %p107, %p108
      %p110 = scmp.ne.s32.totalorder %s99, %s102
      %p111 = scmp.eq.s32.totalorder %s24, 3
      %p112 = por %p110, %p111
      %p113 = scmp.ne.s32.totalorder %s102, %s103
      %p114 = scmp.eq.s32.totalorder %s24, 0
      %p115 = por %p113, %p114
      %p116 = scmp.ne.s32.totalorder %s102, %s103
      %p117 = scmp.eq.s32.totalorder %s25, 3
      %p118 = por %p116, %p117
      %p120 = scmp.ne.s32.totalorder %s103, %s119
      %p121 = scmp.eq.s32.totalorder %s25, 0
      %p122 = por %p120, %p121
      %s124 = sadd.s32 %s123, 1
      %p127 = scmp.eq.s32.totalorder %s19, 3
      %p128 = scmp.ne.s32.totalorder %s123, %s125
      %p129 = scmp.eq.s32.totalorder %s19, 0
      %p130 = por %p128, %p129
      %p131 = scmp.ne.s32.totalorder %s123, %s125
      %p132 = scmp.eq.s32.totalorder %s24, 3
      %p133 = por %p131, %p132
      %p134 = scmp.ne.s32.totalorder %s125, %s126
      %p135 = scmp.eq.s32.totalorder %s24, 0
      %p136 = por %p134, %p135
      %p137 = scmp.ne.s32.totalorder %s125, %s126
      %p138 = scmp.eq.s32.totalorder %s25, 3
      %p139 = por %p137, %p138
      %p141 = scmp.ne.s32.totalorder %s126, %s140
      %p142 = scmp.eq.s32.totalorder %s25, 0
      %p143 = por %p141, %p142
      %s144 = ssub.s32 %s26, %s45
      %s145 = ssub.s32 %s27, %s41
      %s146 = sor.u32 %s144, %s145
      %p147 = scmp.eq.s32.totalorder %s146, 0
      %s149 = sadd.s32 %s148, 1
      %s150 = scalar_select %p147, %s148, %s149
      %p153 = pneg %p147
      %p154 = scmp.eq.s32.totalorder %s19, 3
      %p155 = por %p153, %p154
      %p156 = scmp.ne.s32.totalorder %s148, %s151
      %p157 = scmp.eq.s32.totalorder %s19, 0
      %p158 = por %p156, %p157
      %p159 = scmp.ne.s32.totalorder %s148, %s151
      %p160 = scmp.eq.s32.totalorder %s24, 3
      %p161 = por %p159, %p160
      %p162 = scmp.ne.s32.totalorder %s151, %s152
      %p163 = scmp.eq.s32.totalorder %s24, 0
      %p164 = por %p162, %p163
      %p165 = scmp.ne.s32.totalorder %s151, %s152
      %p166 = scmp.eq.s32.totalorder %s25, 3
      %p167 = por %p165, %p166
      %p169 = scmp.ne.s32.totalorder %s152, %s168
      %p170 = scmp.eq.s32.totalorder %s25, 0
      %p171 = por %p169, %p170
      %p172 = scmp.le.s32.totalorder 1, %s19
      %p173 = scmp.lt.s32.totalorder %s19, 5
      %p174 = pnand %p172, %p173
      %p175 = pneg %p174
      // Predicated region
      $region9: #{tpu_custom_call.1} parent=5 // pred_check
        _
      $region10: #{tpu_custom_call.1} parent=5 // pred_check_branch
        %177 = sbr.rel (%p174) target = $region12
      $region11: #{tpu_custom_call.1} parent=5 // pred_region
        %s178 = ssub.s32 %s19, 1
        // Predicated region
        $region13: #{tpu_custom_call.1} parent=11 // pred_check
          %p179 = pneg %p59
        $region14: #{tpu_custom_call.1} parent=11 // pred_check_branch
          %181 = sbr.rel (%p179) target = $region16
        $region15: #{tpu_custom_call.1} parent=11 // pred_region
          _
        $region16: #{tpu_custom_call.1} parent=11 // pred_fallthru
          _
        // Predicated region
        $region17: #{tpu_custom_call.1} parent=11 // pred_check
          %p182 = pneg %p136
        $region18: #{tpu_custom_call.1} parent=11 // pred_check_branch
          %184 = sbr.rel (%p182) target = $region20
        $region19: #{tpu_custom_call.1} parent=11 // pred_region
          _
        $region20: #{tpu_custom_call.1} parent=11 // pred_fallthru
          _
      $region12: #{tpu_custom_call.1} parent=5 // pred_fallthru
        _
      %p185 = scmp.lt.s32.totalorder %s19, 4
      // Predicated region
      $region21: #{tpu_custom_call.1} parent=5 // pred_check
        %p186 = pneg %p185
      $region22: #{tpu_custom_call.1} parent=5 // pred_check_branch
        %188 = sbr.rel (%p186) target = $region24
      $region23: #{tpu_custom_call.1} parent=5 // pred_region
        // Predicated region
        $region25: #{tpu_custom_call.1} parent=23 // pred_check
          %p189 = pneg %p79
        $region26: #{tpu_custom_call.1} parent=23 // pred_check_branch
          %191 = sbr.rel (%p189) target = $region28
        $region27: #{tpu_custom_call.1} parent=23 // pred_region
          %s192 = sand.u32 %s69, 1
          %s193 = scalar_lea.sflag [#allocation4], %s192
          %s194 = sand.u32 %s69, 1
          %s195 = smul.addr %s194, 32
          %s196 = scalar_lea.vmem [#allocation3], %s195
          %s198 = ssub.s32 512, 512
          %199 = vsyncadd %s193, %s198
          %s200 = smul.addr %s26, 4
          %s201 = smul.addr %s200, 128
          %s202 = scalar_lea.hbm %s1, %s201
          %s203 = sshll.u32 %s196, 4
          %s204 = int_to_ptr.vmem [resolvable:$true] %s203
          %209 = dma.hbm_to_vmem [thread:$0]  %s202, 512, %s204, %s193, 128, 128, 8
        $region28: #{tpu_custom_call.1} parent=23 // pred_fallthru
          _
        // Predicated region
        $region29: #{tpu_custom_call.1} parent=23 // pred_check
          %p210 = pneg %p109
        $region30: #{tpu_custom_call.1} parent=23 // pred_check_branch
          %212 = sbr.rel (%p210) target = $region32
        $region31: #{tpu_custom_call.1} parent=23 // pred_region
          %s213 = sand.u32 %s99, 1
          %s214 = scalar_lea.sflag [#allocation7], %s213
          %s215 = sand.u32 %s99, 1
          %s216 = smul.addr %s215, 8
          %s217 = scalar_lea.vmem [#allocation6], %s216
          %s218 = smul.u32 2, %s27
          %s220 = ssub.s32 128, 128
          %221 = vsyncadd %s214, %s220
          %s222 = sadd.s32 %s28, %s218
          %s223 = smul.addr %s26, 2
          %s224 = sadd.s32 %s222, %s223
          %s225 = smul.addr %s224, 64
          %s226 = scalar_lea.hbm %s2, %s225
          %s227 = sshll.u32 %s217, 4
          %s228 = int_to_ptr.vmem [resolvable:$true] %s227
          %233 = dma.hbm_to_vmem [thread:$0]  %s226, 128, %s228, %s214, 64, 64, 4
        $region32: #{tpu_custom_call.1} parent=23 // pred_fallthru
          _
      $region24: #{tpu_custom_call.1} parent=5 // pred_fallthru
        _
      %p234 = scmp.le.s32.totalorder 1, %s19
      %p235 = scmp.lt.s32.totalorder %s19, 5
      %p236 = pnand %p234, %p235
      %p237 = pneg %p236
      // Predicated region
      $region33: #{tpu_custom_call.1} parent=5 // pred_check
        _
      $region34: #{tpu_custom_call.1} parent=5 // pred_check_branch
        %239 = sbr.rel (%p236) target = $region36
      $region35: #{tpu_custom_call.1} parent=5 // pred_region
        %s240 = ssub.s32 %s19, 1
        %s241 = sand.u32 %s72, 1
        %s242 = scalar_lea.sflag [#allocation4], %s241
        %s243 = sand.u32 %s72, 1
        %s244 = smul.addr %s243, 32
        %s245 = scalar_lea.vmem [#allocation3], %s244
        // Predicated region
        $region37: #{tpu_custom_call.1} parent=35 // pred_check
          %p246 = pneg %p85
        $region38: #{tpu_custom_call.1} parent=35 // pred_check_branch
          %248 = sbr.rel (%p246) target = $region40
        $region39: #{tpu_custom_call.1} parent=35 // pred_region
          %249 = dma.done %s242, 512
        $region40: #{tpu_custom_call.1} parent=35 // pred_fallthru
          _
        %s250 = sand.u32 %s102, 1
        %s251 = scalar_lea.sflag [#allocation7], %s250
        %s252 = sand.u32 %s102, 1
        %s253 = smul.addr %s252, 8
        %s254 = scalar_lea.vmem [#allocation6], %s253
        // Predicated region
        $region41: #{tpu_custom_call.1} parent=35 // pred_check
          %p255 = pneg %p115
        $region42: #{tpu_custom_call.1} parent=35 // pred_check_branch
          %257 = sbr.rel (%p255) target = $region44
        $region43: #{tpu_custom_call.1} parent=35 // pred_region
          %258 = dma.done %s251, 128
        $region44: #{tpu_custom_call.1} parent=35 // pred_fallthru
          _
        %p259 = pneg %p59
        %p260 = pneg %p56
        %s261 = sand.u32 %s72, 1
        %s262 = scalar_lea.sflag [#allocation4], %s261
        %s263 = sand.u32 %s72, 1
        %s264 = smul.addr %s263, 32
        %s265 = scalar_lea.vmem [#allocation3], %s264
        %p266 = pneg %p85
        %p267 = pneg %p82
        %s268 = sand.u32 %s102, 1
        %s269 = scalar_lea.sflag [#allocation7], %s268
        %s270 = sand.u32 %s102, 1
        %s271 = smul.addr %s270, 8
        %s272 = scalar_lea.vmem [#allocation6], %s271
        %p273 = pneg %p115
        %p274 = pneg %p112
        %p275 = pneg %p136
        %p276 = pneg %p133
        %p277 = pneg %p164
        %p278 = pneg %p161
        %s279 = sand.u32 %s151, 1
        %s280 = scalar_lea.sflag [#allocation5], %s279
        %s281 = sand.u32 %s151, 1
        %s282 = smul.addr %s281, 16
        %s283 = scalar_lea.vmem [#allocation8], %s282
        %s284 = smul.u32 2, %s30
        %s285 = smul.u32 2, %s30
        %p286 = scmp.eq.s32.totalorder %s30, 0
        %p287 = scmp.eq.s32.totalorder %s31, 0
        %p288 = pnand %p286, %p287
        %p289 = pneg %p288
        // Predicated region
        $region45: #{tpu_custom_call.1} parent=35 // pred_check
          _
        $region46: #{tpu_custom_call.1} parent=35 // pred_check_branch
          %291 = sbr.rel (%p288) target = $region48
        $region47: #{tpu_custom_call.1} parent=35 // pred_region
          %v292 = vld [vmem:[%s0] sm:$0xff]
          %v293 = vld [vmem:[%s0 + $0x8] sm:$0xff]
          %v294 = vld [vmem:[%s245] sm:$0xff]
          %v295 = vld [vmem:[%s245 + $0x8] sm:$0xff]
          %v296 = vld [vmem:[%s245 + $0x10] sm:$0xff]
          %v297 = vld [vmem:[%s245 + $0x18] sm:$0xff]
          %vm298 = vcmask 261120
          %v300 = vsel %vm298, %v292, 0
          %v303 = vsel %vm298, %v293, 0
          %305 = vmatprep.subr.mxu0 0.0
          %306 = vmatpush1.msra.mxu0 %v294
          %307 = vmatprep.subr.mxu0 0.0
          %308 = vmatpush1.msra.mxu0 %v295
          %309 = vmatprep.subr.mxu0 0.0
          %310 = vmatpush1.msra.mxu0 %v296
          %311 = vmatprep.subr.mxu0 0.0
          %312 = vmatpush1.msra.mxu0 %v297
          %313 = vmatprep.subr.mxu0 0.0
          %314 = vmatpush1.msra.mxu0 0.0
          %315 = vmatprep.subr.mxu0 0.0
          %316 = vmatpush1.msra.mxu0 0.0
          %317 = vmatprep.subr.mxu0 0.0
          %318 = vmatpush1.msra.mxu0 0.0
          %319 = vmatprep.subr.mxu0 0.0
          %320 = vmatpush1.msra.mxu0 0.0
          %321 = vmatprep.subr.mxu0 0.0
          %322 = vmatpush1.msra.mxu0 0.0
          %323 = vmatprep.subr.mxu0 0.0
          %324 = vmatpush1.msra.mxu0 0.0
          %325 = vmatprep.subr.mxu0 0.0
          %326 = vmatpush1.msra.mxu0 0.0
          %327 = vmatprep.subr.mxu0 0.0
          %328 = vmatpush1.msra.mxu0 0.0
          %329 = vmatprep.subr.mxu0 0.0
          %330 = vmatpush1.msra.mxu0 0.0
          %331 = vmatprep.subr.mxu0 0.0
          %332 = vmatpush1.msra.mxu0 0.0
          %333 = vmatprep.subr.mxu0 0.0
          %334 = vmatpush1.msra.mxu0 0.0
          %335 = vmatprep.subr.mxu0 0.0
          %336 = vmatpush1.msra.mxu0 0.0
          %337 = vmatprep.subr.mxu0 0.0
          %338 = vmatpush1.msra.mxu0 0.0
          %339 = vmatprep.subr.mxu0 0.0
          %340 = vmatpush1.msra.mxu0 0.0
          %341 = vmatprep.subr.mxu0 0.0
          %342 = vmatpush1.msra.mxu0 0.0
          %343 = vmatprep.subr.mxu0 0.0
          %344 = vmatpush1.msra.mxu0 0.0
          %345 = vmatprep.subr.mxu0 0.0
          %346 = vmatpush1.msra.mxu0 0.0
          %347 = vmatprep.subr.mxu0 0.0
          %348 = vmatpush1.msra.mxu0 0.0
          %349 = vmatprep.subr.mxu0 0.0
          %350 = vmatpush1.msra.mxu0 0.0
          %351 = vmatprep.subr.mxu0 0.0
          %352 = vmatpush1.msra.mxu0 0.0
          %353 = vmatprep.subr.mxu0 0.0
          %354 = vmatpush1.msra.mxu0 0.0
          %355 = vmatprep.subr.mxu0 0.0
          %356 = vmatpush1.msra.mxu0 0.0
          %357 = vmatprep.subr.mxu0 0.0
          %358 = vmatpush1.msra.mxu0 0.0
          %359 = vmatprep.subr.mxu0 0.0
          %360 = vmatpush1.msra.mxu0 0.0
          %361 = vmatprep.subr.mxu0 0.0
          %362 = vmatpush1.msra.mxu0 0.0
          %363 = vmatprep.subr.mxu0 0.0
          %364 = vmatpush1.msra.mxu0 0.0
          %365 = vmatprep.subr.mxu0 0.0
          %366 = vmatpush1.msra.mxu0 0.0
          %367 = vmatprep.subr.mxu0 0.0
          %368 = vmatpush1.msra.mxu0 0.0
          %369 = vmatprep.mubr.f32.mxu0 0.0
          %370 = vmatmul.mubr.f32.gmra.mrb[0].mxu0 %v300
          %v371 = vpop.f32.mrb[0].mxu0
          %v372 = vadd.f32 0.0, %v371
          %v373 = vpop.f32.mrb[0].mxu0
          %374 = vmatprep.mubr.f32.mxu0 0.0
          %375 = vmatmul.mubr.f32.gmra.mrb[0].mxu0 %v303
          %v376 = vpop.f32.mrb[0].mxu0
          %v377 = vadd.f32 0.0, %v376
          %v378 = vpop.f32.mrb[0].mxu0
          %379 = vdwg.mxu0
          %v380 = vld [vmem:[%s3] sm:$0xff]
          %v381 = vld [vmem:[%s3 + $0x8] sm:$0xff]
          %383 = vset.pattern.permute.xlu0 0
          %384 = vperm.xlu0 %383, %v380
          %v385 = vpop.permute.xlu0 %384
          %388 = vset.pattern.permute.xlu0 0
          %389 = vperm.xlu0 %388, %v381
          %v390 = vpop.permute.xlu0 %389
          %v392 = vmul.f32 %v372, %v385
          %v393 = vmul.f32 %v377, %v390
          %394 = vst.msk [vmem:[#allocation2] sm:$0xff] %vm298, %v392
          %395 = vst.msk [vmem:[#allocation2 + $0x8] sm:$0xff] %vm298, %v393
        $region48: #{tpu_custom_call.1} parent=35 // pred_fallthru
          _
        // Predicated region
        $region49: #{tpu_custom_call.1} parent=35 // pred_check
          %p396 = pneg %p287
        $region50: #{tpu_custom_call.1} parent=35 // pred_check_branch
          %398 = sbr.rel (%p396) target = $region52
        $region51: #{tpu_custom_call.1} parent=35 // pred_region
          %vm399 = vcmask 261120
          %400 = vst.msk [vmem:[%s283] sm:$0xff] %vm399, 0.0
          %401 = vst.msk [vmem:[%s283 + $0x8] sm:$0xff] %vm399, 0.0
        $region52: #{tpu_custom_call.1} parent=35 // pred_fallthru
          _
        %s402 = smul.u32 %s31, 16
        %s403 = scalar_lea.vmem [#allocation2], %s402
        %v404 = vld [vmem:[%s403] sm:$0xff]
        %v405 = vld [vmem:[%s403 + $0x8] sm:$0xff]
        %v406 = vld [vmem:[%s283] sm:$0xff]
        %v407 = vld [vmem:[%s283 + $0x8] sm:$0xff]
        %v408 = vld [vmem:[%s254] sm:$0xf]
        %v409 = vld [vmem:[%s254 + $0x4] sm:$0xf]
        %v410 = vunpack.c.l.bf16 %v408
        %v411 = vunpack.c.l.bf16 %v409
        %vm412 = vcmask 130048
        %v414 = vsel %vm412, %v410, 0
        %v417 = vsel %vm412, %v411, 0
        %419 = vmatprep.subr.mxu0 0.0
        %420 = vmatpush1.msra.mxu0 %v404
        %421 = vmatprep.subr.mxu0 0.0
        %422 = vmatpush1.msra.mxu0 %v405
        %423 = vmatprep.subr.mxu0 0.0
        %424 = vmatpush1.msra.mxu0 0.0
        %425 = vmatprep.subr.mxu0 0.0
        %426 = vmatpush1.msra.mxu0 0.0
        %427 = vmatprep.subr.mxu0 0.0
        %428 = vmatpush1.msra.mxu0 0.0
        %429 = vmatprep.subr.mxu0 0.0
        %430 = vmatpush1.msra.mxu0 0.0
        %431 = vmatprep.subr.mxu0 0.0
        %432 = vmatpush1.msra.mxu0 0.0
        %433 = vmatprep.subr.mxu0 0.0
        %434 = vmatpush1.msra.mxu0 0.0
        %435 = vmatprep.subr.mxu0 0.0
        %436 = vmatpush1.msra.mxu0 0.0
        %437 = vmatprep.subr.mxu0 0.0
        %438 = vmatpush1.msra.mxu0 0.0
        %439 = vmatprep.subr.mxu0 0.0
        %440 = vmatpush1.msra.mxu0 0.0
        %441 = vmatprep.subr.mxu0 0.0
        %442 = vmatpush1.msra.mxu0 0.0
        %443 = vmatprep.subr.mxu0 0.0
        %444 = vmatpush1.msra.mxu0 0.0
        %445 = vmatprep.subr.mxu0 0.0
        %446 = vmatpush1.msra.mxu0 0.0
        %447 = vmatprep.subr.mxu0 0.0
        %448 = vmatpush1.msra.mxu0 0.0
        %449 = vmatprep.subr.mxu0 0.0
        %450 = vmatpush1.msra.mxu0 0.0
        %451 = vmatprep.subr.mxu0 0.0
        %452 = vmatpush1.msra.mxu0 0.0
        %453 = vmatprep.subr.mxu0 0.0
        %454 = vmatpush1.msra.mxu0 0.0
        %455 = vmatprep.subr.mxu0 0.0
        %456 = vmatpush1.msra.mxu0 0.0
        %457 = vmatprep.subr.mxu0 0.0
        %458 = vmatpush1.msra.mxu0 0.0
        %459 = vmatprep.subr.mxu0 0.0
        %460 = vmatpush1.msra.mxu0 0.0
        %461 = vmatprep.subr.mxu0 0.0
        %462 = vmatpush1.msra.mxu0 0.0
        %463 = vmatprep.subr.mxu0 0.0
        %464 = vmatpush1.msra.mxu0 0.0
        %465 = vmatprep.subr.mxu0 0.0
        %466 = vmatpush1.msra.mxu0 0.0
        %467 = vmatprep.subr.mxu0 0.0
        %468 = vmatpush1.msra.mxu0 0.0
        %469 = vmatprep.subr.mxu0 0.0
        %470 = vmatpush1.msra.mxu0 0.0
        %471 = vmatprep.subr.mxu0 0.0
        %472 = vmatpush1.msra.mxu0 0.0
        %473 = vmatprep.subr.mxu0 0.0
        %474 = vmatpush1.msra.mxu0 0.0
        %475 = vmatprep.subr.mxu0 0.0
        %476 = vmatpush1.msra.mxu0 0.0
        %477 = vmatprep.subr.mxu0 0.0
        %478 = vmatpush1.msra.mxu0 0.0
        %479 = vmatprep.subr.mxu0 0.0
        %480 = vmatpush1.msra.mxu0 0.0
        %481 = vmatprep.subr.mxu0 0.0
        %482 = vmatpush1.msra.mxu0 0.0
        %483 = vmatprep.mubr.f32.mxu0 0.0
        %484 = vmatmul.mubr.f32.gmra.mrb[0].mxu0 %v414
        %v485 = vpop.f32.mrb[0].mxu0
        %v486 = vadd.f32 0.0, %v485
        %v487 = vpop.f32.mrb[0].mxu0
        %488 = vmatprep.mubr.f32.mxu0 0.0
        %489 = vmatmul.mubr.f32.gmra.mrb[0].mxu0 %v417
        %v490 = vpop.f32.mrb[0].mxu0
        %v491 = vadd.f32 0.0, %v490
        %v492 = vpop.f32.mrb[0].mxu0
        %493 = vdwg.mxu0
        %v494 = vadd.f32 %v406, %v486
        %v495 = vadd.f32 %v407, %v491
        %vm496 = vcmask 261120
        %497 = vst.msk [vmem:[%s283] sm:$0xff] %vm496, %v494
        %498 = vst.msk [vmem:[%s283 + $0x8] sm:$0xff] %vm496, %v495
        // Predicated region
        $region53: #{tpu_custom_call.1} parent=35 // pred_check
          %p499 = pneg %p287
        $region54: #{tpu_custom_call.1} parent=35 // pred_check_branch
          %501 = sbr.rel (%p499) target = $region56
        $region55: #{tpu_custom_call.1} parent=35 // pred_region
          %s502 = smul.u32 %s30, 16
          %s503 = scalar_lea.vmem %s3, %s502
          %v504 = vld [vmem:[%s503] sm:$0xff]
          %v505 = vld [vmem:[%s503 + $0x8] sm:$0xff]
          %v506 = vld [vmem:[%s283] sm:$0xff]
          %v507 = vld [vmem:[%s283 + $0x8] sm:$0xff]
          %509 = vset.pattern.permute.xlu0 0
          %510 = vperm.xlu0 %509, %v504
          %v511 = vpop.permute.xlu0 %510
          %514 = vset.pattern.permute.xlu0 0
          %515 = vperm.xlu0 %514, %v505
          %v516 = vpop.permute.xlu0 %515
          %v518 = vmul.f32 %v506, %v511
          %v519 = vmul.f32 %v507, %v516
          %v520 = vmax.f32 %v518, 0.0
          %v521 = vmax.f32 %v519, 0.0
          %522 = vst.msk [vmem:[%s283] sm:$0xff] %vm496, %v520
          %523 = vst.msk [vmem:[%s283 + $0x8] sm:$0xff] %vm496, %v521
        $region56: #{tpu_custom_call.1} parent=35 // pred_fallthru
          _
        %s524 = sand.u32 %s151, 1
        %s525 = scalar_lea.sflag [#allocation5], %s524
        %s526 = sand.u32 %s151, 1
        %s527 = smul.addr %s526, 16
        %s528 = scalar_lea.vmem [#allocation8], %s527
        // Predicated region
        $region57: #{tpu_custom_call.1} parent=35 // pred_check
          %p529 = pneg %p161
        $region58: #{tpu_custom_call.1} parent=35 // pred_check_branch
          %531 = sbr.rel (%p529) target = $region60
        $region59: #{tpu_custom_call.1} parent=35 // pred_region
          %s532 = smul.u32 2, %s30
          %s534 = ssub.s32 256, 256
          %535 = vsyncadd %s525, %s534
          %s536 = smul.addr %s29, 2
          %s537 = sadd.s32 %s532, %s536
          %s538 = smul.addr %s537, 128
          %s539 = scalar_lea.hbm %s4, %s538
          %s540 = sshll.u32 %s528, 4
          %s541 = int_to_ptr.vmem [resolvable:$true] %s540
          %546 = dma.vmem_to_hbm [thread:$0]  %s541, 256, %s539, %s525, 128, 128, 8
        $region60: #{tpu_custom_call.1} parent=35 // pred_fallthru
          _
      $region36: #{tpu_custom_call.1} parent=5 // pred_fallthru
        _
      %p547 = scmp.le.s32.totalorder 2, %s19
      // Predicated region
      $region61: #{tpu_custom_call.1} parent=5 // pred_check
        %p548 = pneg %p547
      $region62: #{tpu_custom_call.1} parent=5 // pred_check_branch
        %550 = sbr.rel (%p548) target = $region64
      $region63: #{tpu_custom_call.1} parent=5 // pred_region
        %s551 = ssub.s32 %s19, 2
        // Predicated region
        $region65: #{tpu_custom_call.1} parent=63 // pred_check
          %p552 = pneg %p167
        $region66: #{tpu_custom_call.1} parent=63 // pred_check_branch
          %554 = sbr.rel (%p552) target = $region68
        $region67: #{tpu_custom_call.1} parent=63 // pred_region
          %s555 = sand.u32 %s152, 1
          %s556 = scalar_lea.sflag [#allocation5], %s555
          %s557 = sand.u32 %s152, 1
          %s558 = smul.addr %s557, 16
          %s559 = scalar_lea.vmem [#allocation8], %s558
          %560 = dma.done %s556, 256
        $region68: #{tpu_custom_call.1} parent=63 // pred_fallthru
          _
      $region64: #{tpu_custom_call.1} parent=5 // pred_fallthru
        _
    $region6: #{tpu_custom_call.1} parent=1 // loop_footer
      %s23 = sadd.s32 1, %s19
    $region7: #{tpu_custom_call.1} parent=1 // loop_footer_branch
      %18 = sbr.rel target = $region3
    $region8: #{tpu_custom_call.1} parent=1 // loop_exit
      _
    %561 = vsyncpa [#allocation4], 1
    %s562 = scalar_lea.sflag [#allocation4], 1
    %563 = vsyncpa %s562, 1
    %564 = vsyncpa [#allocation7], 1
    %s565 = scalar_lea.sflag [#allocation7], 1
    %566 = vsyncpa %s565, 1
    %567 = vsyncpa [#allocation5], 1
    %s568 = scalar_lea.sflag [#allocation5], 1
    %569 = vsyncpa %s568, 1

</llo_original>
